<compile_context>
chip_gen: v6e
topology: v6e:2x2x1
jax: 0.10.0
libtpu: 0.0.40
codegen_flags: <defaults>
</compile_context>

<pallas_src>
import jax
import jax.numpy as jnp
from jax.experimental import pallas as pl
from jax.experimental.pallas import tpu as pltpu


def _round_up(n, m):
    return (n + m - 1) // m * m


def _cdiv(a, b):
    return (a + b - 1) // b


def _device_info():
    """Returns (vmem_capacity_bytes, device_kind lowercased) with safe fallbacks."""
    kind = ""
    try:
        kind = jax.devices()[0].device_kind.lower()
    except Exception:
        pass
    vmem_cap = None
    try:
        vmem_cap = int(pltpu.get_tpu_info().vmem_capacity_bytes)
    except Exception:
        pass
    if vmem_cap is None:
        vmem_cap = 64 * 1024 * 1024 if ("7" in kind) else 128 * 1024 * 1024
    return vmem_cap, kind


def _pad_dim(d, prefer_256):
    # Lane/MXU-friendly padding: multiples of 256 on v6e/v7x (2x256x256 MXU)
    # when the dim is big enough to care; otherwise 128 (v5e MXUs are 128x128).
    if prefer_256 and d > 128:
        return _round_up(d, 256)
    return _round_up(d, 128)


def make_ffn_plan(d_model, d_ff, *, max_tile_n=None):
    """Device-aware tiling plan. Compute once, reuse across calls."""
    vmem_cap, kind = _device_info()
    prefer_256 = not any(t in kind for t in ("v2", "v3", "v4", "v5"))

    d_model_p = _pad_dim(d_model, prefer_256)
    d_ff_p0 = _pad_dim(d_ff, prefer_256)

    # Token tile: bigger on v6e (lots of VMEM, fast MXU -> amortize ~0.35us/step
    # overhead); 512 elsewhere (v7x VMEM is tight, v5e is already MXU-bound).
    if max_tile_n is None:
        tile_n = 1024 if "v6" in kind else 512
    else:
        tile_n = max(8, _round_up(max_tile_n, 8))

    # VMEM budget with headroom for compiler scratch / spills
    # (review: ~48-56 MiB on v7x, ~100+ MiB on v5e/v6e).
    budget = int(vmem_cap * 0.85)

    # Fixed per-step VMEM (independent of d_ff chunk size):
    # x tile (2 bufs) + out tile (2 bufs) + f32 accumulator + b2.
    def fixed_bytes(tn):
        return 5 * tn * d_model_p * 4 + 2 * d_model_p * 4

    while tile_n > 256 and fixed_bytes(tile_n) > budget // 2:
        tile_n //= 2

    # Per-d_ff-column VMEM: w1 + w2 chunks (bf16, double-buffered) + b1 chunk
    # + the f32/bf16 intermediate h.
    per_col = 2 * (2 * d_model_p * 2 + 8 * 4) + tile_n * (4 + 2)

    raw_tk = max((budget - fixed_bytes(tile_n)) // per_col, 128)
    tk = max(128, (raw_tk // 128) * 128)
    tk = min(tk, d_ff_p0)
    num_k = _cdiv(d_ff_p0, tk)
    d_ff_p = num_k * tk                     # zero-pad d_ff up to a multiple of tk

    w_bufs = 1 if num_k == 1 else 2
    need = (fixed_bytes(tile_n)
            + w_bufs * (2 * d_model_p * tk * 2 + 8 * tk * 4)
            + tile_n * tk * (4 + 2))
    vmem_limit = int(need * 1.3) + (4 << 20)
    vmem_limit = max(vmem_limit, 32 << 20)
    vmem_limit = min(vmem_limit, int(vmem_cap * 0.85))

    return dict(d_model=d_model, d_ff=d_ff,
                d_model_p=d_model_p, d_ff_p=d_ff_p,
                tile_n=tile_n, tk=tk, num_k=num_k,
                vmem_limit=vmem_limit)


def prepare_ffn_params(plan, w1, b1, w2, b2):
    """Pad + bf16-cast the FFN weights ONCE (hoisted out of the per-call path)."""
    d_model, d_ff = plan["d_model"], plan["d_ff"]
    d_model_p, d_ff_p = plan["d_model_p"], plan["d_ff_p"]
    assert w1.shape == (d_model, d_ff) and w2.shape == (d_ff, d_model)
    w1_p = jnp.pad(w1, ((0, d_model_p - d_model), (0, d_ff_p - d_ff))).astype(jnp.bfloat16)
    w2_p = jnp.pad(w2, ((0, d_ff_p - d_ff), (0, d_model_p - d_model))).astype(jnp.bfloat16)
    b1_p = jnp.pad(b1.reshape(1, d_ff), ((0, 0), (0, d_ff_p - d_ff))).astype(jnp.float32)
    b2_p = jnp.pad(b2.reshape(1, d_model), ((0, 0), (0, d_model_p - d_model))).astype(jnp.float32)
    return w1_p, b1_p, w2_p, b2_p


def ffn_kernel(x_ref, w1_ref, b1_ref, w2_ref, b2_ref, o_ref, acc_ref):
    # x_ref  : (tile_n, d_model_p) f32      w1_ref: (d_model_p, tk)     bf16
    # b1_ref : (1, tk)             f32      w2_ref: (tk, d_model_p)     bf16
    # b2_ref : (1, d_model_p)      f32      o_ref : (tile_n, d_model_p) f32
    # acc_ref: (tile_n, d_model_p) f32 VMEM scratch (residual + fc2 accumulation)
    k = pl.program_id(1)
    x = x_ref[...]                                        # f32, also the residual

    @pl.when(k == 0)
    def _():
        # residual + fc2 bias, added exactly once per token tile
        acc_ref[...] = x + b2_ref[...]

    # bf16 MXU operands, f32 accumulation; bias / ReLU stay in f32.
    h = jnp.dot(x.astype(jnp.bfloat16), w1_ref[...],
                preferred_element_type=jnp.float32)
    h = jnp.maximum(h + b1_ref[...], 0.0)
    acc_ref[...] += jnp.dot(h.astype(jnp.bfloat16), w2_ref[...],
                            preferred_element_type=jnp.float32)

    # TODO(synk): dropout (train-mode stochastic masking) omitted - inference identity.
    @pl.when(k == pl.num_programs(1) - 1)
    def _():
        o_ref[...] = acc_ref[...].astype(o_ref.dtype)


def _spec(shape, index_map, buffers=None):
    """BlockSpec with optional explicit buffer count (graceful fallback)."""
    if buffers is not None and hasattr(pl, "Buffered"):
        try:
            return pl.BlockSpec(shape, index_map, pipeline_mode=pl.Buffered(buffers))
        except TypeError:
            pass
    return pl.BlockSpec(shape, index_map)


def position_wise_ffn(x, params, plan):
    """x: (B, S, d_model) float32, params from prepare_ffn_params. Returns same shape."""
    w1_p, b1_p, w2_p, b2_p = params
    B, S, d_model = x.shape
    d_model_p, d_ff_p = plan["d_model_p"], plan["d_ff_p"]
    tk, num_k = plan["tk"], plan["num_k"]
    N = B * S

    # Clamp the token tile for tiny inputs; keep it a multiple of 8 sublanes.
    tile_n = max(8, min(plan["tile_n"], _round_up(N, 8)))
    N_p = _round_up(N, tile_n)

    x2 = x.reshape(N, d_model)
    if N_p != N or d_model_p != d_model:
        # Only materialize a padded copy when the shapes actually require it
        # (aligned transformer shapes skip this extra HBM read+write).
        x2 = jnp.pad(x2, ((0, N_p - N), (0, d_model_p - d_model)))

    grid = (N_p // tile_n, num_k)

    w_bytes = (w1_p.size + w2_p.size) * 2 + (b1_p.size + b2_p.size) * 4
    cost = pl.CostEstimate(
        flops=4 * N_p * d_model_p * d_ff_p,              # two matmuls
        transcendentals=0,
        bytes_accessed=(2 * N_p * d_model_p * 4          # x in + out
                        + (w_bytes if num_k == 1 else w_bytes * (N_p // tile_n))),
    )

    # Single-buffer resident blocks (constant index_map) -> no wasted VMEM copy.
    w_bufs = 1 if num_k == 1 else None   # default (double) buffering when chunks stream

    out = pl.pallas_call(
        ffn_kernel,
        out_shape=jax.ShapeDtypeStruct((N_p, d_model_p), x.dtype),
        grid=grid,
        in_specs=[
            _spec((tile_n, d_model_p), lambda i, k: (i, 0)),        # x (constant over k)
            _spec((d_model_p, tk), lambda i, k: (0, k), w_bufs),    # w1 chunk
            _spec((1, tk), lambda i, k: (0, k), w_bufs),            # b1 chunk
            _spec((tk, d_model_p), lambda i, k: (k, 0), w_bufs),    # w2 chunk
            _spec((1, d_model_p), lambda i, k: (0, 0), 1),          # b2 (resident)
        ],
        out_specs=pl.BlockSpec((tile_n, d_model_p), lambda i, k: (i, 0)),
        scratch_shapes=[pltpu.VMEM((tile_n, d_model_p), jnp.float32)],
        compiler_params=pltpu.CompilerParams(
            dimension_semantics=("parallel", "arbitrary"),
            vmem_limit_bytes=plan["vmem_limit"],
        ),
        cost_estimate=cost,
    )(x2, w1_p, b1_p, w2_p, b2_p)

    if N_p != N or d_model_p != d_model:
        out = out[:N, :d_model]
    return out.reshape(B, S, d_model)


def _init_linear(key, fan_in, fan_out):
    # Deterministic init mimicking torch.nn.Linear default (uniform +/- 1/sqrt(fan_in)).
    kw, kb = jax.random.split(key)
    bound = 1.0 / jnp.sqrt(fan_in)
    w = jax.random.uniform(kw, (fan_in, fan_out), jnp.float32, -bound, bound)
    b = jax.random.uniform(kb, (fan_out,), jnp.float32, -bound, bound)
    return w, b


if __name__ == "__main__":
    B, S = 2, 8
    d_model, d_ff = 32, 64

    key = jax.random.PRNGKey(0)
    kx, k1, k2 = jax.random.split(key, 3)

    x = jax.random.normal(kx, (B, S, d_model), jnp.float32)
    w1, b1 = _init_linear(k1, d_model, d_ff)
    w2, b2 = _init_linear(k2, d_ff, d_model)

    plan = make_ffn_plan(d_model, d_ff)
    params = prepare_ffn_params(plan, w1, b1, w2, b2)   # hoisted: pad + cast once

    out = position_wise_ffn(x, params, plan)
    out = jax.block_until_ready(out)

    # Pure-JAX f32 reference (kernel uses bf16 matmul operands w/ f32 accumulation,
    # so tolerances are relaxed accordingly).
    ref = x + (jnp.maximum(x @ w1 + b1, 0.0) @ w2 + b2)
    assert out.shape == x.shape and out.dtype == x.dtype
    assert jnp.allclose(out, ref, atol=5e-2, rtol=5e-2)

    print("KERNEL_OK")
</pallas_src>

<mosaic_0001>
module attributes {stable_mosaic.version = 11 : i64} {
  func.func @ffn_kernel(%arg0: i32, %arg1: i32, %arg2: memref<16x128xf32, #tpu.memory_space<vmem>>, %arg3: memref<128x128xbf16, #tpu.memory_space<vmem>>, %arg4: memref<1x128xf32, #tpu.memory_space<vmem>>, %arg5: memref<128x128xbf16, #tpu.memory_space<vmem>>, %arg6: memref<1x128xf32, #tpu.memory_space<vmem>>, %arg7: memref<16x128xf32, #tpu.memory_space<vmem>>, %arg8: memref<16x128xf32, #tpu.memory_space<vmem>>) attributes {dimension_semantics = [#tpu.dimension_semantics<parallel>, #tpu.dimension_semantics<arbitrary>], iteration_bounds = array<i64: 1, 1>, scalar_prefetch = 0 : i64, scratch_operands = 1 : i64, tpu.core_type = #tpu.core_type<tc>, window_params = [{transform_indices = @transform_0, window_bounds = array<i64: 16, 128>}, {pipeline_mode = #tpu.pipeline_mode<synchronous>, transform_indices = @transform_1, window_bounds = array<i64: 128, 128>}, {pipeline_mode = #tpu.pipeline_mode<synchronous>, transform_indices = @transform_2, window_bounds = array<i64: 1, 128>}, {pipeline_mode = #tpu.pipeline_mode<synchronous>, transform_indices = @transform_3, window_bounds = array<i64: 128, 128>}, {pipeline_mode = #tpu.pipeline_mode<synchronous>, transform_indices = @transform_4, window_bounds = array<i64: 1, 128>}, {transform_indices = @transform_5, window_bounds = array<i64: 16, 128>}]} {
    %c0 = arith.constant 0 : index
    %c0_0 = arith.constant 0 : index
    %0 = vector.load %arg2[%c0, %c0_0] : memref<16x128xf32, #tpu.memory_space<vmem>>, vector<16x128xf32>
    %c0_i32 = arith.constant 0 : i32
    %1 = arith.cmpi eq, %arg1, %c0_i32 : i32
    %2 = arith.extui %1 : i1 to i32
    %c0_i32_1 = arith.constant 0 : i32
    %3 = arith.cmpi ne, %2, %c0_i32_1 : i32
    scf.if %3 {
      %c0_16 = arith.constant 0 : index
      %c0_17 = arith.constant 0 : index
      %21 = vector.load %arg6[%c0_16, %c0_17] : memref<1x128xf32, #tpu.memory_space<vmem>>, vector<1x128xf32>
      %22 = vector.broadcast %21 : vector<1x128xf32> to vector<16x128xf32>
      %23 = arith.addf %0, %22 : vector<16x128xf32>
      %c0_18 = arith.constant 0 : index
      %c0_19 = arith.constant 0 : index
      %24 = vector.load %arg8[%c0_18, %c0_19] : memref<16x128xf32, #tpu.memory_space<vmem>>, vector<16x128xf32>
      tpu.vector_store %arg8[%c0_18, %c0_19], %23 {strides = array<i32>} : memref<16x128xf32, #tpu.memory_space<vmem>>, vector<16x128xf32>,
    } else {
    }
    %4 = arith.truncf %0 : vector<16x128xf32> to vector<16x128xbf16>
    %c0_2 = arith.constant 0 : index
    %c0_3 = arith.constant 0 : index
    %5 = vector.load %arg3[%c0_2, %c0_3] : memref<128x128xbf16, #tpu.memory_space<vmem>>, vector<128x128xbf16>
    %cst = arith.constant dense<0.000000e+00> : vector<16x128xf32>
    %6 = tpu.matmul %4, %5, %cst {dimension_numbers = #tpu.dot_dimension_numbers<[1], [0], [0], [1], [0, 0, 1, 1], [], []>} : vector<16x128xbf16>, vector<128x128xbf16>, vector<16x128xf32> -> vector<16x128xf32>
    %c0_4 = arith.constant 0 : index
    %c0_5 = arith.constant 0 : index
    %7 = vector.load %arg4[%c0_4, %c0_5] : memref<1x128xf32, #tpu.memory_space<vmem>>, vector<1x128xf32>
    %8 = vector.broadcast %7 : vector<1x128xf32> to vector<16x128xf32>
    %9 = arith.addf %6, %8 : vector<16x128xf32>
    %cst_6 = arith.constant 0.000000e+00 : f32
    %10 = vector.broadcast %cst_6 : f32 to vector<16x128xf32>
    %11 = arith.maximumf %9, %10 : vector<16x128xf32>
    %c0_7 = arith.constant 0 : index
    %c0_8 = arith.constant 0 : index
    %12 = vector.load %arg8[%c0_7, %c0_8] : memref<16x128xf32, #tpu.memory_space<vmem>>, vector<16x128xf32>
    %13 = arith.truncf %11 : vector<16x128xf32> to vector<16x128xbf16>
    %c0_9 = arith.constant 0 : index
    %c0_10 = arith.constant 0 : index
    %14 = vector.load %arg5[%c0_9, %c0_10] : memref<128x128xbf16, #tpu.memory_space<vmem>>, vector<128x128xbf16>
    %cst_11 = arith.constant dense<0.000000e+00> : vector<16x128xf32>
    %15 = tpu.matmul %13, %14, %cst_11 {dimension_numbers = #tpu.dot_dimension_numbers<[1], [0], [0], [1], [0, 0, 1, 1], [], []>} : vector<16x128xbf16>, vector<128x128xbf16>, vector<16x128xf32> -> vector<16x128xf32>
    %16 = arith.addf %12, %15 : vector<16x128xf32>
    %c0_12 = arith.constant 0 : index
    %c0_13 = arith.constant 0 : index
    %17 = vector.load %arg8[%c0_12, %c0_13] : memref<16x128xf32, #tpu.memory_space<vmem>>, vector<16x128xf32>
    tpu.vector_store %arg8[%c0_12, %c0_13], %16 {strides = array<i32>} : memref<16x128xf32, #tpu.memory_space<vmem>>, vector<16x128xf32>,
    %c0_i32_14 = arith.constant 0 : i32
    %18 = arith.cmpi eq, %arg1, %c0_i32_14 : i32
    %19 = arith.extui %18 : i1 to i32
    %c0_i32_15 = arith.constant 0 : i32
    %20 = arith.cmpi ne, %19, %c0_i32_15 : i32
    scf.if %20 {
      %c0_16 = arith.constant 0 : index
      %c0_17 = arith.constant 0 : index
      %21 = vector.load %arg8[%c0_16, %c0_17] : memref<16x128xf32, #tpu.memory_space<vmem>>, vector<16x128xf32>
      %c0_18 = arith.constant 0 : index
      %c0_19 = arith.constant 0 : index
      %22 = vector.load %arg7[%c0_18, %c0_19] : memref<16x128xf32, #tpu.memory_space<vmem>>, vector<16x128xf32>
      tpu.vector_store %arg7[%c0_18, %c0_19], %21 {strides = array<i32>} : memref<16x128xf32, #tpu.memory_space<vmem>>, vector<16x128xf32>,
    } else {
    }
    return
  }
  func.func @transform_0(%arg0: i32, %arg1: i32) -> (i32, i32) {
    %c0_i32 = arith.constant 0 : i32
    %c0_i32_0 = arith.constant 0 : i32
    return %arg0, %c0_i32 : i32, i32
  }
  func.func @transform_1(%arg0: i32, %arg1: i32) -> (i32, i32) {
    %c0_i32 = arith.constant 0 : i32
    %c0_i32_0 = arith.constant 0 : i32
    return %c0_i32, %arg1 : i32, i32
  }
  func.func @transform_2(%arg0: i32, %arg1: i32) -> (i32, i32) {
    %c0_i32 = arith.constant 0 : i32
    %c0_i32_0 = arith.constant 0 : i32
    return %c0_i32, %arg1 : i32, i32
  }
  func.func @transform_3(%arg0: i32, %arg1: i32) -> (i32, i32) {
    %c0_i32 = arith.constant 0 : i32
    %c0_i32_0 = arith.constant 0 : i32
    return %arg1, %c0_i32 : i32, i32
  }
  func.func @transform_4(%arg0: i32, %arg1: i32) -> (i32, i32) {
    %c0_i32 = arith.constant 0 : i32
    %c0_i32_0 = arith.constant 0 : i32
    %c0_i32_1 = arith.constant 0 : i32
    return %c0_i32, %c0_i32_0 : i32, i32
  }
  func.func @transform_5(%arg0: i32, %arg1: i32) -> (i32, i32) {
    %c0_i32 = arith.constant 0 : i32
    %c0_i32_0 = arith.constant 0 : i32
    return %arg0, %c0_i32 : i32, i32
  }
}

</mosaic_0001>

<llo_original>
// kernel: tpu_custom_call.1
$region0: #{tpu_custom_call.1}
  #allocation0 [shape = 'u32[]', space=smem, size = 0x4, offset = 0x4, fixed_abs, tag = 'smem constant byte address 0x4 - core index']
  #allocation1 [shape = 'u32[144,128]{1,0:T(1,128)}', space=vmem, size = 0x12000, scoped, tag = 'internal scratch']
  #allocation2 [shape = 'f32[16,128]{1,0:T(8,128)}', space=vmem, size = 0x2000, scoped, tag = 'scratch operand']
  %s0 = inlined_call_operand.hbm [shape: f32[16,128], index: 0, kind: input, shape index: {}]
  %s1 = inlined_call_operand.hbm [shape: bf16[128,128], index: 1, kind: input, shape index: {}]
  %s2 = inlined_call_operand.vmem [shape: f32[1,128], index: 2, kind: input, shape index: {}]
  %s3 = inlined_call_operand.hbm [shape: bf16[128,128], index: 3, kind: input, shape index: {}]
  %s4 = inlined_call_operand.vmem [shape: f32[1,128], index: 4, kind: input, shape index: {}]
  %s5 = inlined_call_operand.hbm [shape: f32[16,128], index: 5, kind: output, shape index: {}]
  %s6 = sld [smem:[#allocation0]]
  $region50: #{tpu_custom_call.1} parent=0
    _
  %s8 = ssub.s32 1, %s6
  %s9 = scalar_select 0, %s8, %s6
  $region1: #{tpu_custom_call.1} parent=0
    #allocation3 [shape = 'u8[8192]{0}', space=vmem, size = 0x2000, scoped, tag = 'input window, operand 0, single buffered']
    #allocation4 [shape = 's32[1]{0}', space=sflag, size = 0x4, scoped, tag = 'scoped memory for tpu_custom_call.1']
    #allocation5 [shape = 's32[1]{0}', space=sflag, size = 0x4, scoped, tag = 'scoped memory for tpu_custom_call.1']
    #allocation6 [shape = 'u8[32768]{0}', space=vmem, size = 0x8000, scoped, tag = 'input window, operand 1, single buffered']
    #allocation7 [shape = 's32[1]{0}', space=sflag, size = 0x4, scoped, tag = 'scoped memory for tpu_custom_call.1']
    #allocation8 [shape = 'u8[32768]{0}', space=vmem, size = 0x8000, scoped, tag = 'input window, operand 3, single buffered']
    #allocation9 [shape = 'u8[8192]{0}', space=vmem, size = 0x2000, scoped, tag = 'output window, operand 0, single buffered']
    %10 = vsyncpa [#allocation4], 0
    %11 = vsyncpa [#allocation7], 0
    %12 = vsyncpa [#allocation5], 0
    // Predicated region
    $region2: #{tpu_custom_call.1} parent=1 // pred_check
      _
    $region3: #{tpu_custom_call.1} parent=1 // pred_check_branch
      %14 = sbr.rel (0) target = $region5
    $region4: #{tpu_custom_call.1} parent=1 // pred_region
      %s16 = ssub.s32 256, 256
      %17 = vsyncadd [#allocation4], %s16
      %s18 = sshll.u32 [#allocation3], 4
      %s19 = int_to_ptr.vmem [resolvable:$true] %s18
      %24 = dma.hbm_to_vmem [thread:$0]  %s0, 256, %s19, [#allocation4], 128, 128, 8
    $region5: #{tpu_custom_call.1} parent=1 // pred_fallthru
      _
    // Predicated region
    $region6: #{tpu_custom_call.1} parent=1 // pred_check
      _
    $region7: #{tpu_custom_call.1} parent=1 // pred_check_branch
      %26 = sbr.rel (0) target = $region9
    $region8: #{tpu_custom_call.1} parent=1 // pred_region
      %s28 = ssub.s32 1024, 1024
      %29 = vsyncadd [#allocation7], %s28
      %s30 = sshll.u32 [#allocation6], 4
      %s31 = int_to_ptr.vmem [resolvable:$true] %s30
      %36 = dma.hbm_to_vmem [thread:$0]  %s1, 1024, %s31, [#allocation7], 64, 64, 4
    $region9: #{tpu_custom_call.1} parent=1 // pred_fallthru
      _
    // Predicated region
    $region10: #{tpu_custom_call.1} parent=1 // pred_check
      _
    $region11: #{tpu_custom_call.1} parent=1 // pred_check_branch
      %38 = sbr.rel (0) target = $region13
    $region12: #{tpu_custom_call.1} parent=1 // pred_region
      _
    $region13: #{tpu_custom_call.1} parent=1 // pred_fallthru
      _
    // Predicated region
    $region14: #{tpu_custom_call.1} parent=1 // pred_check
      _
    $region15: #{tpu_custom_call.1} parent=1 // pred_check_branch
      %40 = sbr.rel (0) target = $region17
    $region16: #{tpu_custom_call.1} parent=1 // pred_region
      %s42 = ssub.s32 1024, 1024
      %43 = vsyncadd [#allocation7], %s42
      %s44 = sshll.u32 [#allocation8], 4
      %s45 = int_to_ptr.vmem [resolvable:$true] %s44
      %50 = dma.hbm_to_vmem [thread:$0]  %s3, 1024, %s45, [#allocation7], 64, 64, 4
    $region17: #{tpu_custom_call.1} parent=1 // pred_fallthru
      _
    // Predicated region
    $region18: #{tpu_custom_call.1} parent=1 // pred_check
      _
    $region19: #{tpu_custom_call.1} parent=1 // pred_check_branch
      %52 = sbr.rel (0) target = $region21
    $region20: #{tpu_custom_call.1} parent=1 // pred_region
      _
    $region21: #{tpu_custom_call.1} parent=1 // pred_fallthru
      _
    // Predicated region
    $region22: #{tpu_custom_call.1} parent=1 // pred_check
      _
    $region23: #{tpu_custom_call.1} parent=1 // pred_check_branch
      %54 = sbr.rel (0) target = $region25
    $region24: #{tpu_custom_call.1} parent=1 // pred_region
      %55 = dma.done [#allocation4], 256
    $region25: #{tpu_custom_call.1} parent=1 // pred_fallthru
      _
    // Predicated region
    $region26: #{tpu_custom_call.1} parent=1 // pred_check
      _
    $region27: #{tpu_custom_call.1} parent=1 // pred_check_branch
      %57 = sbr.rel (0) target = $region29
    $region28: #{tpu_custom_call.1} parent=1 // pred_region
      %58 = dma.done [#allocation7], 1024
    $region29: #{tpu_custom_call.1} parent=1 // pred_fallthru
      _
    // Predicated region
    $region30: #{tpu_custom_call.1} parent=1 // pred_check
      _
    $region31: #{tpu_custom_call.1} parent=1 // pred_check_branch
      %60 = sbr.rel (0) target = $region33
    $region32: #{tpu_custom_call.1} parent=1 // pred_region
      %61 = dma.done [#allocation7], 1024
    $region33: #{tpu_custom_call.1} parent=1 // pred_fallthru
      _
    %v63 = vld [vmem:[#allocation3] sm:$0xff]
    %v64 = vld [vmem:[#allocation3 + $0x8] sm:$0xff]
    %p65 = scmp.eq.s32.totalorder 0, 0
    // Predicated region
    $region34: #{tpu_custom_call.1} parent=1 // pred_check
      %p66 = pneg %p65
    $region35: #{tpu_custom_call.1} parent=1 // pred_check_branch
      %68 = sbr.rel (%p66) target = $region37
    $region36: #{tpu_custom_call.1} parent=1 // pred_region
      %v69 = vld [vmem:[%s4] sm:$0x1]
      %v71 = vlaneseq
      %v72 = vshrl.u32 %v71, 7
      %v73 = vsub.s32 0, %v72
      %v74 = vrot.slane %v69, %v73
      %v76 = vadd.f32 %v63, %v74
      %v77 = vadd.f32 %v64, %v74
      %78 = vst [vmem:[#allocation2] sm:$0xff] %v76
      %79 = vst [vmem:[#allocation2 + $0x8] sm:$0xff] %v77
    $region37: #{tpu_custom_call.1} parent=1 // pred_fallthru
      _
    %v80 = vpack.c.bf16 %v64, %v63
    %v81 = vld [vmem:[#allocation6] sm:$0xf]
    %v82 = vld [vmem:[#allocation6 + $0x4] sm:$0xf]
    %v83 = vld [vmem:[#allocation6 + $0x8] sm:$0xf]
    %v84 = vld [vmem:[#allocation6 + $0xc] sm:$0xf]
    %v85 = vld [vmem:[#allocation6 + $0x10] sm:$0xf]
    %v86 = vld [vmem:[#allocation6 + $0x14] sm:$0xf]
    %v87 = vld [vmem:[#allocation6 + $0x18] sm:$0xf]
    %v88 = vld [vmem:[#allocation6 + $0x1c] sm:$0xf]
    %v89 = vld [vmem:[#allocation6 + $0x20] sm:$0xf]
    %v90 = vld [vmem:[#allocation6 + $0x24] sm:$0xf]
    %v91 = vld [vmem:[#allocation6 + $0x28] sm:$0xf]
    %v92 = vld [vmem:[#allocation6 + $0x2c] sm:$0xf]
    %v93 = vld [vmem:[#allocation6 + $0x30] sm:$0xf]
    %v94 = vld [vmem:[#allocation6 + $0x34] sm:$0xf]
    %v95 = vld [vmem:[#allocation6 + $0x38] sm:$0xf]
    %v96 = vld [vmem:[#allocation6 + $0x3c] sm:$0xf]
    %v97 = vld [vmem:[%s2] sm:$0x1]
    %v99 = vlaneseq
    %v100 = vshrl.u32 %v99, 7
    %v101 = vsub.s32 0, %v100
    %v102 = vrot.slane %v97, %v101
    %v120 = vunpack.c.l.b16 %v81
    %v121 = vunpack.c.l.b16 %v82
    %v122 = vunpack.c.l.b16 %v83
    %v123 = vunpack.c.l.b16 %v84
    %v124 = vunpack.c.l.b16 %v85
    %v125 = vunpack.c.l.b16 %v86
    %v126 = vunpack.c.l.b16 %v87
    %v127 = vunpack.c.l.b16 %v88
    %v128 = vunpack.c.l.b16 %v89
    %v129 = vunpack.c.l.b16 %v90
    %v130 = vunpack.c.l.b16 %v91
    %v131 = vunpack.c.l.b16 %v92
    %v132 = vunpack.c.l.b16 %v93
    %v133 = vunpack.c.l.b16 %v94
    %v134 = vunpack.c.l.b16 %v95
    %v135 = vunpack.c.l.b16 %v96
    %v136 = vpack.c.b16 %v121, %v120
    %v137 = vpack.c.b16 %v123, %v122
    %v138 = vpack.c.b16 %v125, %v124
    %v139 = vpack.c.b16 %v127, %v126
    %v140 = vpack.c.b16 %v129, %v128
    %v141 = vpack.c.b16 %v131, %v130
    %v142 = vpack.c.b16 %v133, %v132
    %v143 = vpack.c.b16 %v135, %v134
    %152 = vmatprep.subr.bf16.mxu0 0
    %153 = vmatpush1.bf16.msra.mxu0 %v143
    %154 = vmatprep.subr.bf16.mxu0 0
    %155 = vmatpush1.bf16.msra.mxu0 %v142
    %156 = vmatprep.subr.bf16.mxu0 0
    %157 = vmatpush1.bf16.msra.mxu0 %v141
    %158 = vmatprep.subr.bf16.mxu0 0
    %159 = vmatpush1.bf16.msra.mxu0 %v140
    %160 = vmatprep.subr.bf16.mxu0 0
    %161 = vmatpush1.bf16.msra.mxu0 %v139
    %162 = vmatprep.subr.bf16.mxu0 0
    %163 = vmatpush1.bf16.msra.mxu0 %v138
    %164 = vmatprep.subr.bf16.mxu0 0
    %165 = vmatpush1.bf16.msra.mxu0 %v137
    %166 = vmatprep.subr.bf16.mxu0 0
    %167 = vmatpush1.bf16.msra.mxu0 %v136
    %168 = vmatprep.subr.bf16.mxu0 0
    %169 = vmatpush2.bf16.msra.mxu0 0
    %170 = vmatprep.subr.bf16.mxu0 0
    %171 = vmatpush2.bf16.msra.mxu0 0
    %172 = vmatprep.subr.bf16.mxu0 0
    %173 = vmatpush2.bf16.msra.mxu0 0
    %174 = vmatprep.subr.bf16.mxu0 0
    %175 = vmatpush2.bf16.msra.mxu0 0
    %176 = vmatprep.subr.bf16.mxu0 0
    %177 = vmatpush2.bf16.msra.mxu0 0
    %178 = vmatprep.subr.bf16.mxu0 0
    %179 = vmatpush2.bf16.msra.mxu0 0
    %180 = vmatprep.subr.bf16.mxu0 0
    %181 = vmatpush2.bf16.msra.mxu0 0
    %182 = vmatprep.subr.bf16.mxu0 0
    %183 = vmatpush2.bf16.msra.mxu0 0
    %184 = vmatprep.mubr.bf16.mxu0 0
    %185 = vmatmul.mubr.bf16.gmra.mxu0 %v80
    %v186 = vpop.f32.mrf.mxu0
    %v187 = vadd.f32 %v102, %v186
    %v188 = vpop.f32.mrf.mxu0
    %v189 = vpop.f32.mrf.mxu0
    %v190 = vadd.f32 %v102, %v189
    %v191 = vpop.f32.mrf.mxu0
    %192 = vdwg.mxu0
    %v193 = vmax.f32 %v187, 0.0
    %v194 = vmax.f32 %v190, 0.0
    %v195 = vld [vmem:[#allocation2] sm:$0xff]
    %v196 = vld [vmem:[#allocation2 + $0x8] sm:$0xff]
    %v197 = vpack.c.bf16 %v194, %v193
    %v198 = vld [vmem:[#allocation8] sm:$0xf]
    %v199 = vld [vmem:[#allocation8 + $0x4] sm:$0xf]
    %v200 = vld [vmem:[#allocation8 + $0x8] sm:$0xf]
    %v201 = vld [vmem:[#allocation8 + $0xc] sm:$0xf]
    %v202 = vld [vmem:[#allocation8 + $0x10] sm:$0xf]
    %v203 = vld [vmem:[#allocation8 + $0x14] sm:$0xf]
    %v204 = vld [vmem:[#allocation8 + $0x18] sm:$0xf]
    %v205 = vld [vmem:[#allocation8 + $0x1c] sm:$0xf]
    %v206 = vld [vmem:[#allocation8 + $0x20] sm:$0xf]
    %v207 = vld [vmem:[#allocation8 + $0x24] sm:$0xf]
    %v208 = vld [vmem:[#allocation8 + $0x28] sm:$0xf]
    %v209 = vld [vmem:[#allocation8 + $0x2c] sm:$0xf]
    %v210 = vld [vmem:[#allocation8 + $0x30] sm:$0xf]
    %v211 = vld [vmem:[#allocation8 + $0x34] sm:$0xf]
    %v212 = vld [vmem:[#allocation8 + $0x38] sm:$0xf]
    %v213 = vld [vmem:[#allocation8 + $0x3c] sm:$0xf]
    %v230 = vunpack.c.l.b16 %v198
    %v231 = vunpack.c.l.b16 %v199
    %v232 = vunpack.c.l.b16 %v200
    %v233 = vunpack.c.l.b16 %v201
    %v234 = vunpack.c.l.b16 %v202
    %v235 = vunpack.c.l.b16 %v203
    %v236 = vunpack.c.l.b16 %v204
    %v237 = vunpack.c.l.b16 %v205
    %v238 = vunpack.c.l.b16 %v206
    %v239 = vunpack.c.l.b16 %v207
    %v240 = vunpack.c.l.b16 %v208
    %v241 = vunpack.c.l.b16 %v209
    %v242 = vunpack.c.l.b16 %v210
    %v243 = vunpack.c.l.b16 %v211
    %v244 = vunpack.c.l.b16 %v212
    %v245 = vunpack.c.l.b16 %v213
    %v246 = vpack.c.b16 %v231, %v230
    %v247 = vpack.c.b16 %v233, %v232
    %v248 = vpack.c.b16 %v235, %v234
    %v249 = vpack.c.b16 %v237, %v236
    %v250 = vpack.c.b16 %v239, %v238
    %v251 = vpack.c.b16 %v241, %v240
    %v252 = vpack.c.b16 %v243, %v242
    %v253 = vpack.c.b16 %v245, %v244
    %262 = vmatprep.subr.bf16.mxu0 0
    %263 = vmatpush1.bf16.msra.mxu0 %v253
    %264 = vmatprep.subr.bf16.mxu0 0
    %265 = vmatpush1.bf16.msra.mxu0 %v252
    %266 = vmatprep.subr.bf16.mxu0 0
    %267 = vmatpush1.bf16.msra.mxu0 %v251
    %268 = vmatprep.subr.bf16.mxu0 0
    %269 = vmatpush1.bf16.msra.mxu0 %v250
    %270 = vmatprep.subr.bf16.mxu0 0
    %271 = vmatpush1.bf16.msra.mxu0 %v249
    %272 = vmatprep.subr.bf16.mxu0 0
    %273 = vmatpush1.bf16.msra.mxu0 %v248
    %274 = vmatprep.subr.bf16.mxu0 0
    %275 = vmatpush1.bf16.msra.mxu0 %v247
    %276 = vmatprep.subr.bf16.mxu0 0
    %277 = vmatpush1.bf16.msra.mxu0 %v246
    %278 = vmatprep.subr.bf16.mxu0 0
    %279 = vmatpush2.bf16.msra.mxu0 0
    %280 = vmatprep.subr.bf16.mxu0 0
    %281 = vmatpush2.bf16.msra.mxu0 0
    %282 = vmatprep.subr.bf16.mxu0 0
    %283 = vmatpush2.bf16.msra.mxu0 0
    %284 = vmatprep.subr.bf16.mxu0 0
    %285 = vmatpush2.bf16.msra.mxu0 0
    %286 = vmatprep.subr.bf16.mxu0 0
    %287 = vmatpush2.bf16.msra.mxu0 0
    %288 = vmatprep.subr.bf16.mxu0 0
    %289 = vmatpush2.bf16.msra.mxu0 0
    %290 = vmatprep.subr.bf16.mxu0 0
    %291 = vmatpush2.bf16.msra.mxu0 0
    %292 = vmatprep.subr.bf16.mxu0 0
    %293 = vmatpush2.bf16.msra.mxu0 0
    %294 = vmatprep.mubr.bf16.mxu0 0
    %295 = vmatmul.mubr.bf16.gmra.mxu0 %v197
    %v296 = vpop.f32.mrf.mxu0
    %v297 = vadd.f32 0.0, %v296
    %v298 = vpop.f32.mrf.mxu0
    %v299 = vpop.f32.mrf.mxu0
    %v300 = vadd.f32 0.0, %v299
    %v301 = vpop.f32.mrf.mxu0
    %302 = vdwg.mxu0
    %v303 = vadd.f32 %v195, %v297
    %v304 = vadd.f32 %v196, %v300
    %305 = vst [vmem:[#allocation2] sm:$0xff] %v303
    %306 = vst [vmem:[#allocation2 + $0x8] sm:$0xff] %v304
    // Predicated region
    $region38: #{tpu_custom_call.1} parent=1 // pred_check
      %p307 = pneg %p65
    $region39: #{tpu_custom_call.1} parent=1 // pred_check_branch
      %309 = sbr.rel (%p307) target = $region41
    $region40: #{tpu_custom_call.1} parent=1 // pred_region
      %v310 = vld [vmem:[#allocation2] sm:$0xff]
      %v311 = vld [vmem:[#allocation2 + $0x8] sm:$0xff]
      %312 = vst [vmem:[#allocation9] sm:$0xff] %v310
      %313 = vst [vmem:[#allocation9 + $0x8] sm:$0xff] %v311
    $region41: #{tpu_custom_call.1} parent=1 // pred_fallthru
      _
    // Predicated region
    $region42: #{tpu_custom_call.1} parent=1 // pred_check
      _
    $region43: #{tpu_custom_call.1} parent=1 // pred_check_branch
      %315 = sbr.rel (0) target = $region45
    $region44: #{tpu_custom_call.1} parent=1 // pred_region
      %s317 = ssub.s32 256, 256
      %318 = vsyncadd [#allocation5], %s317
      %s319 = sshll.u32 [#allocation9], 4
      %s320 = int_to_ptr.vmem [resolvable:$true] %s319
      %325 = dma.vmem_to_hbm [thread:$0]  %s320, 256, %s5, [#allocation5], 128, 128, 8
    $region45: #{tpu_custom_call.1} parent=1 // pred_fallthru
      _
    // Predicated region
    $region46: #{tpu_custom_call.1} parent=1 // pred_check
      _
    $region47: #{tpu_custom_call.1} parent=1 // pred_check_branch
      %327 = sbr.rel (0) target = $region49
    $region48: #{tpu_custom_call.1} parent=1 // pred_region
      %328 = dma.done [#allocation5], 256
    $region49: #{tpu_custom_call.1} parent=1 // pred_fallthru
      _
    %329 = vsyncpa [#allocation4], 1
    %330 = vsyncpa [#allocation7], 1
    %331 = vsyncpa [#allocation5], 1

</llo_original>
